<compile_context>
chip_gen: v7x
topology: tpu7x:2x2x1
jax: 0.10.0
libtpu: 0.0.40
codegen_flags: <defaults>
</compile_context>

<pallas_src>
import jax
import jax.numpy as jnp
from jax.experimental import pallas as pl
from jax.experimental.pallas import tpu as pltpu

INPUT_DIM = 4
HID1 = 128
HID2 = 256
HID3 = 128
OUTPUT_DIM = 6
OUT_PAD = 8  # pad final layer columns 6 -> 8


def iknet_kernel(x_ref, w1_ref, b1_ref, w2_ref, b2_ref, w3_ref, b3_ref,
                 w4_ref, b4_ref, o_ref):
    x = x_ref[...]            # (TM, 4)  f32
    w1 = w1_ref[...]          # (4, 128) f32

    # Layer 1 (K=4): VPU broadcast-MAC; an MXU pass here would be ~25% of the
    # matmul cycles for <1% of the FLOPs.
    h1 = (x[:, 0:1] * w1[0:1, :]
          + x[:, 1:2] * w1[1:2, :]
          + x[:, 2:3] * w1[2:3, :]
          + x[:, 3:4] * w1[3:4, :]
          + b1_ref[...])
    h1 = jnp.maximum(h1, 0.0)

    # Layers 2-4: bf16 MXU matmuls, f32 accumulation, f32 bias + ReLU.
    h2 = jnp.dot(h1.astype(jnp.bfloat16), w2_ref[...],
                 preferred_element_type=jnp.float32) + b2_ref[...]
    h2 = jnp.maximum(h2, 0.0)

    h3 = jnp.dot(h2.astype(jnp.bfloat16), w3_ref[...],
                 preferred_element_type=jnp.float32) + b3_ref[...]
    h3 = jnp.maximum(h3, 0.0)

    out = jnp.dot(h3.astype(jnp.bfloat16), w4_ref[...],
                  preferred_element_type=jnp.float32) + b4_ref[...]
    o_ref[...] = out.astype(o_ref.dtype)


def iknet_forward(x, params, *, tile_rows=None):
    """x: (B, 4) float.  params: dict of f32 weights/biases.  Returns (B, 6) f32."""
    B = x.shape[0]
    if tile_rows is None:
        # 256-row tiles (full MXU height on v6e/v7x, multiple of 128 for v5e);
        # small batches collapse to a single sublane-aligned tile.
        TM = 256 if B >= 256 else max(8, ((B + 7) // 8) * 8)
    else:
        TM = tile_rows
    B_pad = ((B + TM - 1) // TM) * TM

    x32 = x.astype(jnp.float32)
    if B_pad != B:
        x32 = jnp.pad(x32, ((0, B_pad - B), (0, 0)))

    # One-time parameter prep: bf16 weights for MXU layers, f32 biases,
    # zero-padded final layer (6 -> 8 columns).
    w1 = params["w1"].astype(jnp.float32)   # layer 1 stays on the VPU in f32
    b1 = params["b1"].astype(jnp.float32)
    w2 = params["w2"].astype(jnp.bfloat16)
    b2 = params["b2"].astype(jnp.float32)
    w3 = params["w3"].astype(jnp.bfloat16)
    b3 = params["b3"].astype(jnp.float32)
    w4 = jnp.zeros((HID3, OUT_PAD), jnp.bfloat16).at[:, :OUTPUT_DIM].set(
        params["w4"].astype(jnp.bfloat16))
    b4 = jnp.zeros((1, OUT_PAD), jnp.float32).at[:, :OUTPUT_DIM].set(
        params["b4"].astype(jnp.float32))

    num_tiles = B_pad // TM
    tiled = lambda shape: pl.BlockSpec(shape, lambda i: (i, 0))
    resident = lambda shape: pl.BlockSpec(shape, lambda i: (0, 0))

    out = pl.pallas_call(
        iknet_kernel,
        out_shape=jax.ShapeDtypeStruct((B_pad, OUT_PAD), jnp.float32),
        grid_spec=pl.GridSpec(
            grid=(num_tiles,),
            in_specs=[
                tiled((TM, INPUT_DIM)),
                resident((INPUT_DIM, HID1)), resident((1, HID1)),
                resident((HID1, HID2)),      resident((1, HID2)),
                resident((HID2, HID3)),      resident((1, HID3)),
                resident((HID3, OUT_PAD)),   resident((1, OUT_PAD)),
            ],
            out_specs=tiled((TM, OUT_PAD)),
        ),
        compiler_params=pltpu.CompilerParams(
            dimension_semantics=("parallel",)),
    )(x32, w1, b1, w2, b2, w3, b3, w4, b4)

    return out[:B, :OUTPUT_DIM]


def init_params(key):
    """Deterministic init mimicking torch.nn.Linear default U[-1/sqrt(fan_in), +...]."""
    dims = [(INPUT_DIM, HID1), (HID1, HID2), (HID2, HID3), (HID3, OUTPUT_DIM)]
    params = {}
    for idx, (fin, fout) in enumerate(dims, start=1):
        key, kw, kb = jax.random.split(key, 3)
        bound = 1.0 / jnp.sqrt(jnp.float32(fin))
        params[f"w{idx}"] = jax.random.uniform(
            kw, (fin, fout), jnp.float32, minval=-bound, maxval=bound)
        # biases kept 2D (1, fout) so kernel refs are >= 2D
        params[f"b{idx}"] = jax.random.uniform(
            kb, (1, fout), jnp.float32, minval=-bound, maxval=bound)
    return params


def reference_forward(x, params):
    """Pure-JAX reference with the same bf16-input / f32-accumulate numerics."""
    h = jnp.dot(x, params["w1"],
                precision=jax.lax.Precision.HIGHEST) + params["b1"]
    h = jnp.maximum(h, 0.0)
    for i in (2, 3, 4):
        w = params[f"w{i}"].astype(jnp.bfloat16)
        h = jnp.dot(h.astype(jnp.bfloat16), w,
                    preferred_element_type=jnp.float32) + params[f"b{i}"]
        if i < 4:
            h = jnp.maximum(h, 0.0)
    return h


if __name__ == "__main__":
    key = jax.random.PRNGKey(0)
    key, kx = jax.random.split(key)

    B = 8
    x = jax.random.normal(kx, (B, INPUT_DIM), jnp.float32)
    params = init_params(key)

    out = jax.block_until_ready(iknet_forward(x, params))
    ref = reference_forward(x, params)

    assert out.shape == (B, OUTPUT_DIM)
    assert jnp.allclose(out, ref, atol=2e-2, rtol=2e-2), (
        "max abs err = %f" % float(jnp.max(jnp.abs(out - ref))))

    print("KERNEL_OK")
</pallas_src>

<mosaic_0001>
module attributes {stable_mosaic.version = 11 : i64} {
  func.func @iknet_kernel(%arg0: i32, %arg1: memref<8x4xf32, #tpu.memory_space<vmem>>, %arg2: memref<4x128xf32, #tpu.memory_space<vmem>>, %arg3: memref<1x128xf32, #tpu.memory_space<vmem>>, %arg4: memref<128x256xbf16, #tpu.memory_space<vmem>>, %arg5: memref<1x256xf32, #tpu.memory_space<vmem>>, %arg6: memref<256x128xbf16, #tpu.memory_space<vmem>>, %arg7: memref<1x128xf32, #tpu.memory_space<vmem>>, %arg8: memref<128x8xbf16, #tpu.memory_space<vmem>>, %arg9: memref<1x8xf32, #tpu.memory_space<vmem>>, %arg10: memref<8x8xf32, #tpu.memory_space<vmem>>) attributes {dimension_semantics = [#tpu.dimension_semantics<parallel>], iteration_bounds = array<i64: 1>, scalar_prefetch = 0 : i64, scratch_operands = 0 : i64, tpu.core_type = #tpu.core_type<tc>, window_params = [{transform_indices = @transform_0, window_bounds = array<i64: 8, 4>}, {pipeline_mode = #tpu.pipeline_mode<synchronous>, transform_indices = @transform_1, window_bounds = array<i64: 4, 128>}, {pipeline_mode = #tpu.pipeline_mode<synchronous>, transform_indices = @transform_2, window_bounds = array<i64: 1, 128>}, {pipeline_mode = #tpu.pipeline_mode<synchronous>, transform_indices = @transform_3, window_bounds = array<i64: 128, 256>}, {pipeline_mode = #tpu.pipeline_mode<synchronous>, transform_indices = @transform_4, window_bounds = array<i64: 1, 256>}, {pipeline_mode = #tpu.pipeline_mode<synchronous>, transform_indices = @transform_5, window_bounds = array<i64: 256, 128>}, {pipeline_mode = #tpu.pipeline_mode<synchronous>, transform_indices = @transform_6, window_bounds = array<i64: 1, 128>}, {pipeline_mode = #tpu.pipeline_mode<synchronous>, transform_indices = @transform_7, window_bounds = array<i64: 128, 8>}, {pipeline_mode = #tpu.pipeline_mode<synchronous>, transform_indices = @transform_8, window_bounds = array<i64: 1, 8>}, {transform_indices = @transform_9, window_bounds = array<i64: 8, 8>}]} {
    %c0 = arith.constant 0 : index
    %c0_0 = arith.constant 0 : index
    %0 = vector.load %arg1[%c0, %c0_0] : memref<8x4xf32, #tpu.memory_space<vmem>>, vector<8x4xf32>
    %c0_1 = arith.constant 0 : index
    %c0_2 = arith.constant 0 : index
    %1 = vector.load %arg2[%c0_1, %c0_2] : memref<4x128xf32, #tpu.memory_space<vmem>>, vector<4x128xf32>
    %2 = vector.extract_strided_slice %0 {offsets = [0, 0], sizes = [8, 1], strides = [1, 1]} : vector<8x4xf32> to vector<8x1xf32>
    %3 = vector.extract_strided_slice %1 {offsets = [0, 0], sizes = [1, 128], strides = [1, 1]} : vector<4x128xf32> to vector<1x128xf32>
    %4 = vector.broadcast %2 : vector<8x1xf32> to vector<8x128xf32>
    %5 = vector.broadcast %3 : vector<1x128xf32> to vector<8x128xf32>
    %6 = arith.mulf %4, %5 : vector<8x128xf32>
    %7 = vector.extract_strided_slice %0 {offsets = [0, 1], sizes = [8, 1], strides = [1, 1]} : vector<8x4xf32> to vector<8x1xf32>
    %8 = vector.extract_strided_slice %1 {offsets = [1, 0], sizes = [1, 128], strides = [1, 1]} : vector<4x128xf32> to vector<1x128xf32>
    %9 = vector.broadcast %7 : vector<8x1xf32> to vector<8x128xf32>
    %10 = vector.broadcast %8 : vector<1x128xf32> to vector<8x128xf32>
    %11 = arith.mulf %9, %10 : vector<8x128xf32>
    %12 = arith.addf %6, %11 : vector<8x128xf32>
    %13 = vector.extract_strided_slice %0 {offsets = [0, 2], sizes = [8, 1], strides = [1, 1]} : vector<8x4xf32> to vector<8x1xf32>
    %14 = vector.extract_strided_slice %1 {offsets = [2, 0], sizes = [1, 128], strides = [1, 1]} : vector<4x128xf32> to vector<1x128xf32>
    %15 = vector.broadcast %13 : vector<8x1xf32> to vector<8x128xf32>
    %16 = vector.broadcast %14 : vector<1x128xf32> to vector<8x128xf32>
    %17 = arith.mulf %15, %16 : vector<8x128xf32>
    %18 = arith.addf %12, %17 : vector<8x128xf32>
    %19 = vector.extract_strided_slice %0 {offsets = [0, 3], sizes = [8, 1], strides = [1, 1]} : vector<8x4xf32> to vector<8x1xf32>
    %20 = vector.extract_strided_slice %1 {offsets = [3, 0], sizes = [1, 128], strides = [1, 1]} : vector<4x128xf32> to vector<1x128xf32>
    %21 = vector.broadcast %19 : vector<8x1xf32> to vector<8x128xf32>
    %22 = vector.broadcast %20 : vector<1x128xf32> to vector<8x128xf32>
    %23 = arith.mulf %21, %22 : vector<8x128xf32>
    %24 = arith.addf %18, %23 : vector<8x128xf32>
    %c0_3 = arith.constant 0 : index
    %c0_4 = arith.constant 0 : index
    %25 = vector.load %arg3[%c0_3, %c0_4] : memref<1x128xf32, #tpu.memory_space<vmem>>, vector<1x128xf32>
    %26 = vector.broadcast %25 : vector<1x128xf32> to vector<8x128xf32>
    %27 = arith.addf %24, %26 : vector<8x128xf32>
    %cst = arith.constant 0.000000e+00 : f32
    %28 = vector.broadcast %cst : f32 to vector<8x128xf32>
    %29 = arith.maximumf %27, %28 : vector<8x128xf32>
    %30 = arith.truncf %29 : vector<8x128xf32> to vector<8x128xbf16>
    %c0_5 = arith.constant 0 : index
    %c0_6 = arith.constant 0 : index
    %31 = vector.load %arg4[%c0_5, %c0_6] : memref<128x256xbf16, #tpu.memory_space<vmem>>, vector<128x256xbf16>
    %cst_7 = arith.constant dense<0.000000e+00> : vector<8x256xf32>
    %32 = tpu.matmul %30, %31, %cst_7 {dimension_numbers = #tpu.dot_dimension_numbers<[1], [0], [0], [1], [0, 0, 1, 1], [], []>} : vector<8x128xbf16>, vector<128x256xbf16>, vector<8x256xf32> -> vector<8x256xf32>
    %c0_8 = arith.constant 0 : index
    %c0_9 = arith.constant 0 : index
    %33 = vector.load %arg5[%c0_8, %c0_9] : memref<1x256xf32, #tpu.memory_space<vmem>>, vector<1x256xf32>
    %34 = vector.broadcast %33 : vector<1x256xf32> to vector<8x256xf32>
    %35 = arith.addf %32, %34 : vector<8x256xf32>
    %cst_10 = arith.constant 0.000000e+00 : f32
    %36 = vector.broadcast %cst_10 : f32 to vector<8x256xf32>
    %37 = arith.maximumf %35, %36 : vector<8x256xf32>
    %38 = arith.truncf %37 : vector<8x256xf32> to vector<8x256xbf16>
    %c0_11 = arith.constant 0 : index
    %c0_12 = arith.constant 0 : index
    %39 = vector.load %arg6[%c0_11, %c0_12] : memref<256x128xbf16, #tpu.memory_space<vmem>>, vector<256x128xbf16>
    %cst_13 = arith.constant dense<0.000000e+00> : vector<8x128xf32>
    %40 = tpu.matmul %38, %39, %cst_13 {dimension_numbers = #tpu.dot_dimension_numbers<[1], [0], [0], [1], [0, 0, 1, 1], [], []>} : vector<8x256xbf16>, vector<256x128xbf16>, vector<8x128xf32> -> vector<8x128xf32>
    %c0_14 = arith.constant 0 : index
    %c0_15 = arith.constant 0 : index
    %41 = vector.load %arg7[%c0_14, %c0_15] : memref<1x128xf32, #tpu.memory_space<vmem>>, vector<1x128xf32>
    %42 = vector.broadcast %41 : vector<1x128xf32> to vector<8x128xf32>
    %43 = arith.addf %40, %42 : vector<8x128xf32>
    %cst_16 = arith.constant 0.000000e+00 : f32
    %44 = vector.broadcast %cst_16 : f32 to vector<8x128xf32>
    %45 = arith.maximumf %43, %44 : vector<8x128xf32>
    %46 = arith.truncf %45 : vector<8x128xf32> to vector<8x128xbf16>
    %c0_17 = arith.constant 0 : index
    %c0_18 = arith.constant 0 : index
    %47 = vector.load %arg8[%c0_17, %c0_18] : memref<128x8xbf16, #tpu.memory_space<vmem>>, vector<128x8xbf16>
    %cst_19 = arith.constant dense<0.000000e+00> : vector<8x8xf32>
    %48 = tpu.matmul %46, %47, %cst_19 {dimension_numbers = #tpu.dot_dimension_numbers<[1], [0], [0], [1], [0, 0, 1, 1], [], []>} : vector<8x128xbf16>, vector<128x8xbf16>, vector<8x8xf32> -> vector<8x8xf32>
    %c0_20 = arith.constant 0 : index
    %c0_21 = arith.constant 0 : index
    %49 = vector.load %arg9[%c0_20, %c0_21] : memref<1x8xf32, #tpu.memory_space<vmem>>, vector<1x8xf32>
    %50 = vector.broadcast %49 : vector<1x8xf32> to vector<8x8xf32>
    %51 = arith.addf %48, %50 : vector<8x8xf32>
    %c0_22 = arith.constant 0 : index
    %c0_23 = arith.constant 0 : index
    %52 = vector.load %arg10[%c0_22, %c0_23] : memref<8x8xf32, #tpu.memory_space<vmem>>, vector<8x8xf32>
    tpu.vector_store %arg10[%c0_22, %c0_23], %51 {strides = array<i32>} : memref<8x8xf32, #tpu.memory_space<vmem>>, vector<8x8xf32>,
    return
  }
  func.func @transform_0(%arg0: i32) -> (i32, i32) {
    %c0_i32 = arith.constant 0 : i32
    %c0_i32_0 = arith.constant 0 : i32
    return %arg0, %c0_i32 : i32, i32
  }
  func.func @transform_1(%arg0: i32) -> (i32, i32) {
    %c0_i32 = arith.constant 0 : i32
    %c0_i32_0 = arith.constant 0 : i32
    %c0_i32_1 = arith.constant 0 : i32
    return %c0_i32, %c0_i32_0 : i32, i32
  }
  func.func @transform_2(%arg0: i32) -> (i32, i32) {
    %c0_i32 = arith.constant 0 : i32
    %c0_i32_0 = arith.constant 0 : i32
    %c0_i32_1 = arith.constant 0 : i32
    return %c0_i32, %c0_i32_0 : i32, i32
  }
  func.func @transform_3(%arg0: i32) -> (i32, i32) {
    %c0_i32 = arith.constant 0 : i32
    %c0_i32_0 = arith.constant 0 : i32
    %c0_i32_1 = arith.constant 0 : i32
    return %c0_i32, %c0_i32_0 : i32, i32
  }
  func.func @transform_4(%arg0: i32) -> (i32, i32) {
    %c0_i32 = arith.constant 0 : i32
    %c0_i32_0 = arith.constant 0 : i32
    %c0_i32_1 = arith.constant 0 : i32
    return %c0_i32, %c0_i32_0 : i32, i32
  }
  func.func @transform_5(%arg0: i32) -> (i32, i32) {
    %c0_i32 = arith.constant 0 : i32
    %c0_i32_0 = arith.constant 0 : i32
    %c0_i32_1 = arith.constant 0 : i32
    return %c0_i32, %c0_i32_0 : i32, i32
  }
  func.func @transform_6(%arg0: i32) -> (i32, i32) {
    %c0_i32 = arith.constant 0 : i32
    %c0_i32_0 = arith.constant 0 : i32
    %c0_i32_1 = arith.constant 0 : i32
    return %c0_i32, %c0_i32_0 : i32, i32
  }
  func.func @transform_7(%arg0: i32) -> (i32, i32) {
    %c0_i32 = arith.constant 0 : i32
    %c0_i32_0 = arith.constant 0 : i32
    %c0_i32_1 = arith.constant 0 : i32
    return %c0_i32, %c0_i32_0 : i32, i32
  }
  func.func @transform_8(%arg0: i32) -> (i32, i32) {
    %c0_i32 = arith.constant 0 : i32
    %c0_i32_0 = arith.constant 0 : i32
    %c0_i32_1 = arith.constant 0 : i32
    return %c0_i32, %c0_i32_0 : i32, i32
  }
  func.func @transform_9(%arg0: i32) -> (i32, i32) {
    %c0_i32 = arith.constant 0 : i32
    %c0_i32_0 = arith.constant 0 : i32
    return %arg0, %c0_i32 : i32, i32
  }
}

</mosaic_0001>

<llo_original>
// kernel: tpu_custom_call.1
$region0: #{tpu_custom_call.1}
  #allocation0 [shape = 'u32[]', space=smem, size = 0x4, offset = 0x4, fixed_abs, tag = 'smem constant byte address 0x4 - core index']
  #allocation1 [shape = 'u32[144,128]{1,0:T(1,128)}', space=vmem, size = 0x12000, scoped, tag = 'internal scratch']
  %s0 = inlined_call_operand.vmem [shape: f32[8,4], index: 0, kind: input, shape index: {}]
  %s1 = inlined_call_operand.vmem [shape: f32[4,128], index: 1, kind: input, shape index: {}]
  %s2 = inlined_call_operand.vmem [shape: f32[1,128], index: 2, kind: input, shape index: {}]
  %s3 = inlined_call_operand.hbm [shape: bf16[128,256], index: 3, kind: input, shape index: {}]
  %s4 = inlined_call_operand.vmem [shape: f32[1,256], index: 4, kind: input, shape index: {}]
  %s5 = inlined_call_operand.hbm [shape: bf16[256,128], index: 5, kind: input, shape index: {}]
  %s6 = inlined_call_operand.vmem [shape: f32[1,128], index: 6, kind: input, shape index: {}]
  %s7 = inlined_call_operand.vmem [shape: bf16[128,8], index: 7, kind: input, shape index: {}]
  %s8 = inlined_call_operand.vmem [shape: f32[1,8], index: 8, kind: input, shape index: {}]
  %s9 = inlined_call_operand.hbm [shape: f32[8,8], index: 9, kind: output, shape index: {}]
  %s10 = sld [smem:[#allocation0]]
  $region54: #{tpu_custom_call.1} parent=0
    _
  %s12 = ssub.s32 1, %s10
  %s13 = scalar_select 0, %s12, %s10
  $region1: #{tpu_custom_call.1} parent=0
    #allocation2 [shape = 'u8[65536]{0}', space=vmem, size = 0x10000, scoped, tag = 'input window, operand 3, single buffered']
    #allocation3 [shape = 's32[1]{0}', space=sflag, size = 0x4, scoped, tag = 'scoped memory for tpu_custom_call.1']
    #allocation4 [shape = 's32[1]{0}', space=sflag, size = 0x4, scoped, tag = 'scoped memory for tpu_custom_call.1']
    #allocation5 [shape = 'u8[65536]{0}', space=vmem, size = 0x10000, scoped, tag = 'input window, operand 5, single buffered']
    #allocation6 [shape = 's32[1]{0}', space=sflag, size = 0x4, scoped, tag = 'scoped memory for tpu_custom_call.1']
    #allocation7 [shape = 'u8[4096]{0}', space=vmem, size = 0x1000, scoped, tag = 'output window, operand 0, single buffered']
    %14 = vsyncpa [#allocation3], 0
    %15 = vsyncpa [#allocation6], 0
    %16 = vsyncpa [#allocation4], 0
    // Predicated region
    $region2: #{tpu_custom_call.1} parent=1 // pred_check
      _
    $region3: #{tpu_custom_call.1} parent=1 // pred_check_branch
      %18 = sbr.rel (0) target = $region5
    $region4: #{tpu_custom_call.1} parent=1 // pred_region
      _
    $region5: #{tpu_custom_call.1} parent=1 // pred_fallthru
      _
    // Predicated region
    $region6: #{tpu_custom_call.1} parent=1 // pred_check
      _
    $region7: #{tpu_custom_call.1} parent=1 // pred_check_branch
      %20 = sbr.rel (0) target = $region9
    $region8: #{tpu_custom_call.1} parent=1 // pred_region
      _
    $region9: #{tpu_custom_call.1} parent=1 // pred_fallthru
      _
    // Predicated region
    $region10: #{tpu_custom_call.1} parent=1 // pred_check
      _
    $region11: #{tpu_custom_call.1} parent=1 // pred_check_branch
      %22 = sbr.rel (0) target = $region13
    $region12: #{tpu_custom_call.1} parent=1 // pred_region
      _
    $region13: #{tpu_custom_call.1} parent=1 // pred_fallthru
      _
    // Predicated region
    $region14: #{tpu_custom_call.1} parent=1 // pred_check
      _
    $region15: #{tpu_custom_call.1} parent=1 // pred_check_branch
      %24 = sbr.rel (0) target = $region17
    $region16: #{tpu_custom_call.1} parent=1 // pred_region
      %s26 = ssub.s32 2048, 2048
      %27 = vsyncadd [#allocation3], %s26
      %s28 = sshll.u32 [#allocation2], 4
      %s29 = int_to_ptr.vmem [resolvable:$true] %s28
      %34 = dma.hbm_to_vmem [thread:$0]  %s3, 2048, %s29, [#allocation3], 128, 128, 8
    $region17: #{tpu_custom_call.1} parent=1 // pred_fallthru
      _
    // Predicated region
    $region18: #{tpu_custom_call.1} parent=1 // pred_check
      _
    $region19: #{tpu_custom_call.1} parent=1 // pred_check_branch
      %36 = sbr.rel (0) target = $region21
    $region20: #{tpu_custom_call.1} parent=1 // pred_region
      _
    $region21: #{tpu_custom_call.1} parent=1 // pred_fallthru
      _
    // Predicated region
    $region22: #{tpu_custom_call.1} parent=1 // pred_check
      _
    $region23: #{tpu_custom_call.1} parent=1 // pred_check_branch
      %38 = sbr.rel (0) target = $region25
    $region24: #{tpu_custom_call.1} parent=1 // pred_region
      %s40 = ssub.s32 2048, 2048
      %41 = vsyncadd [#allocation6], %s40
      %s42 = sshll.u32 [#allocation5], 4
      %s43 = int_to_ptr.vmem [resolvable:$true] %s42
      %48 = dma.hbm_to_vmem [thread:$0]  %s5, 2048, %s43, [#allocation6], 64, 64, 4
    $region25: #{tpu_custom_call.1} parent=1 // pred_fallthru
      _
    // Predicated region
    $region26: #{tpu_custom_call.1} parent=1 // pred_check
      _
    $region27: #{tpu_custom_call.1} parent=1 // pred_check_branch
      %50 = sbr.rel (0) target = $region29
    $region28: #{tpu_custom_call.1} parent=1 // pred_region
      _
    $region29: #{tpu_custom_call.1} parent=1 // pred_fallthru
      _
    // Predicated region
    $region30: #{tpu_custom_call.1} parent=1 // pred_check
      _
    $region31: #{tpu_custom_call.1} parent=1 // pred_check_branch
      %52 = sbr.rel (0) target = $region33
    $region32: #{tpu_custom_call.1} parent=1 // pred_region
      _
    $region33: #{tpu_custom_call.1} parent=1 // pred_fallthru
      _
    // Predicated region
    $region34: #{tpu_custom_call.1} parent=1 // pred_check
      _
    $region35: #{tpu_custom_call.1} parent=1 // pred_check_branch
      %54 = sbr.rel (0) target = $region37
    $region36: #{tpu_custom_call.1} parent=1 // pred_region
      _
    $region37: #{tpu_custom_call.1} parent=1 // pred_fallthru
      _
    // Predicated region
    $region38: #{tpu_custom_call.1} parent=1 // pred_check
      _
    $region39: #{tpu_custom_call.1} parent=1 // pred_check_branch
      %56 = sbr.rel (0) target = $region41
    $region40: #{tpu_custom_call.1} parent=1 // pred_region
      %57 = dma.done [#allocation3], 2048
    $region41: #{tpu_custom_call.1} parent=1 // pred_fallthru
      _
    // Predicated region
    $region42: #{tpu_custom_call.1} parent=1 // pred_check
      _
    $region43: #{tpu_custom_call.1} parent=1 // pred_check_branch
      %59 = sbr.rel (0) target = $region45
    $region44: #{tpu_custom_call.1} parent=1 // pred_region
      %60 = dma.done [#allocation6], 2048
    $region45: #{tpu_custom_call.1} parent=1 // pred_fallthru
      _
    %v62 = vld [vmem:[%s0] sm:$0xff]
    %v63 = vld [vmem:[%s1] sm:$0xf]
    %65 = vset.pattern.permute.xlu0 0
    %66 = vperm.xlu0 %65, %v62
    %v67 = vpop.permute.xlu0 %66
    %v69 = vlaneseq
    %v70 = vshrl.u32 %v69, 7
    %v71 = vsub.s32 0, %v70
    %v72 = vrot.slane %v63, %v71
    %v73 = vmul.f32 %v67, %v72
    %74 = vset.pattern.permute.xlu0 1
    %75 = vperm.xlu0 %74, %v62
    %v76 = vpop.permute.xlu0 %75
    %v78 = vlaneseq
    %v79 = vshrl.u32 %v78, 7
    %v80 = vsub.s32 1, %v79
    %v81 = vrot.slane %v63, %v80
    %v82 = vmul.f32 %v76, %v81
    %v83 = vadd.f32 %v73, %v82
    %84 = vset.pattern.permute.xlu0 2
    %85 = vperm.xlu0 %84, %v62
    %v86 = vpop.permute.xlu0 %85
    %v88 = vlaneseq
    %v89 = vshrl.u32 %v88, 7
    %v90 = vsub.s32 2, %v89
    %v91 = vrot.slane %v63, %v90
    %v92 = vmul.f32 %v86, %v91
    %v93 = vadd.f32 %v83, %v92
    %94 = vset.pattern.permute.xlu0 3
    %95 = vperm.xlu0 %94, %v62
    %v96 = vpop.permute.xlu0 %95
    %v98 = vlaneseq
    %v99 = vshrl.u32 %v98, 7
    %v100 = vsub.s32 3, %v99
    %v101 = vrot.slane %v63, %v100
    %v102 = vmul.f32 %v96, %v101
    %v103 = vadd.f32 %v93, %v102
    %v104 = vld [vmem:[%s2] sm:$0x1]
    %v106 = vlaneseq
    %v107 = vshrl.u32 %v106, 7
    %v108 = vsub.s32 0, %v107
    %v109 = vrot.slane %v104, %v108
    %v111 = vadd.f32 %v103, %v109
    %v112 = vmax.f32 %v111, 0.0
    %v113 = vpack.c.bf16 %v112, %v112
    %v114 = vld [vmem:[#allocation2] sm:$0xff]
    %v115 = vld [vmem:[#allocation2 + $0x8] sm:$0xff]
    %v116 = vld [vmem:[#allocation2 + $0x10] sm:$0xff]
    %v117 = vld [vmem:[#allocation2 + $0x18] sm:$0xff]
    %v118 = vld [vmem:[#allocation2 + $0x20] sm:$0xff]
    %v119 = vld [vmem:[#allocation2 + $0x28] sm:$0xff]
    %v120 = vld [vmem:[#allocation2 + $0x30] sm:$0xff]
    %v121 = vld [vmem:[#allocation2 + $0x38] sm:$0xff]
    %v122 = vld [vmem:[#allocation2 + $0x40] sm:$0xff]
    %v123 = vld [vmem:[#allocation2 + $0x48] sm:$0xff]
    %v124 = vld [vmem:[#allocation2 + $0x50] sm:$0xff]
    %v125 = vld [vmem:[#allocation2 + $0x58] sm:$0xff]
    %v126 = vld [vmem:[#allocation2 + $0x60] sm:$0xff]
    %v127 = vld [vmem:[#allocation2 + $0x68] sm:$0xff]
    %v128 = vld [vmem:[#allocation2 + $0x70] sm:$0xff]
    %v129 = vld [vmem:[#allocation2 + $0x78] sm:$0xff]
    %v130 = vld [vmem:[%s4] sm:$0x3]
    %v132 = vlaneseq
    %v133 = vshrl.u32 %v132, 7
    %v134 = vsub.s32 0, %v133
    %v135 = vrot.slane %v130, %v134
    %v136 = vlaneseq
    %v137 = vshrl.u32 %v136, 7
    %v138 = vsub.s32 1, %v137
    %v139 = vrot.slane %v130, %v138
    %v158 = vunpack.c.l.b16 %v114
    %v159 = vunpack.c.h.b16 %v114
    %v160 = vunpack.c.l.b16 %v115
    %v161 = vunpack.c.h.b16 %v115
    %v162 = vunpack.c.l.b16 %v116
    %v163 = vunpack.c.h.b16 %v116
    %v164 = vunpack.c.l.b16 %v117
    %v165 = vunpack.c.h.b16 %v117
    %v166 = vunpack.c.l.b16 %v118
    %v167 = vunpack.c.h.b16 %v118
    %v168 = vunpack.c.l.b16 %v119
    %v169 = vunpack.c.h.b16 %v119
    %v170 = vunpack.c.l.b16 %v120
    %v171 = vunpack.c.h.b16 %v120
    %v172 = vunpack.c.l.b16 %v121
    %v173 = vunpack.c.h.b16 %v121
    %v174 = vunpack.c.l.b16 %v122
    %v175 = vunpack.c.h.b16 %v122
    %v176 = vunpack.c.l.b16 %v123
    %v177 = vunpack.c.h.b16 %v123
    %v178 = vunpack.c.l.b16 %v124
    %v179 = vunpack.c.h.b16 %v124
    %v180 = vunpack.c.l.b16 %v125
    %v181 = vunpack.c.h.b16 %v125
    %v182 = vunpack.c.l.b16 %v126
    %v183 = vunpack.c.h.b16 %v126
    %v184 = vunpack.c.l.b16 %v127
    %v185 = vunpack.c.h.b16 %v127
    %v186 = vunpack.c.l.b16 %v128
    %v187 = vunpack.c.h.b16 %v128
    %v188 = vunpack.c.l.b16 %v129
    %v189 = vunpack.c.h.b16 %v129
    %v190 = vpack.c.b16 %v160, %v158
    %v191 = vpack.c.b16 %v161, %v159
    %v192 = vpack.c.b16 %v164, %v162
    %v193 = vpack.c.b16 %v165, %v163
    %v194 = vpack.c.b16 %v168, %v166
    %v195 = vpack.c.b16 %v169, %v167
    %v196 = vpack.c.b16 %v172, %v170
    %v197 = vpack.c.b16 %v173, %v171
    %v198 = vpack.c.b16 %v176, %v174
    %v199 = vpack.c.b16 %v177, %v175
    %v200 = vpack.c.b16 %v180, %v178
    %v201 = vpack.c.b16 %v181, %v179
    %v202 = vpack.c.b16 %v184, %v182
    %v203 = vpack.c.b16 %v185, %v183
    %v204 = vpack.c.b16 %v188, %v186
    %v205 = vpack.c.b16 %v189, %v187
    %222 = vmatprep.subr.bf16.mxu0 %v191
    %223 = vmatpush1.bf16.msra.mxu0 %v190
    %224 = vmatprep.subr.bf16.mxu0 %v193
    %225 = vmatpush1.bf16.msra.mxu0 %v192
    %226 = vmatprep.subr.bf16.mxu0 %v195
    %227 = vmatpush1.bf16.msra.mxu0 %v194
    %228 = vmatprep.subr.bf16.mxu0 %v197
    %229 = vmatpush1.bf16.msra.mxu0 %v196
    %230 = vmatprep.subr.bf16.mxu0 %v199
    %231 = vmatpush1.bf16.msra.mxu0 %v198
    %232 = vmatprep.subr.bf16.mxu0 %v201
    %233 = vmatpush1.bf16.msra.mxu0 %v200
    %234 = vmatprep.subr.bf16.mxu0 %v203
    %235 = vmatpush1.bf16.msra.mxu0 %v202
    %236 = vmatprep.subr.bf16.mxu0 %v205
    %237 = vmatpush1.bf16.msra.mxu0 %v204
    %238 = vmatprep.subr.bf16.mxu0 0
    %239 = vmatpush1.bf16.msra.mxu0 0
    %240 = vmatprep.subr.bf16.mxu0 0
    %241 = vmatpush1.bf16.msra.mxu0 0
    %242 = vmatprep.subr.bf16.mxu0 0
    %243 = vmatpush1.bf16.msra.mxu0 0
    %244 = vmatprep.subr.bf16.mxu0 0
    %245 = vmatpush1.bf16.msra.mxu0 0
    %246 = vmatprep.subr.bf16.mxu0 0
    %247 = vmatpush1.bf16.msra.mxu0 0
    %248 = vmatprep.subr.bf16.mxu0 0
    %249 = vmatpush1.bf16.msra.mxu0 0
    %250 = vmatprep.subr.bf16.mxu0 0
    %251 = vmatpush1.bf16.msra.mxu0 0
    %252 = vmatprep.subr.bf16.mxu0 0
    %253 = vmatpush1.bf16.msra.mxu0 0
    %254 = vmatprep.mubr.bf16.mxu0 0
    %255 = vmatmul.mubr.bf16.gmra.mrb[0].mxu0 %v113
    %v256 = vpop.f32.mrb[0].mxu0
    %v257 = vadd.f32 %v135, %v256
    %v258 = vpop.f32.mrb[0].mxu0
    %v259 = vadd.f32 %v139, %v258
    %v260 = vpop.f32.mrb[0].mxu0
    %v261 = vpop.f32.mrb[0].mxu0
    %262 = vdwg.mxu0
    %v263 = vmax.f32 %v257, 0.0
    %v264 = vmax.f32 %v259, 0.0
    %v265 = vpack.c.bf16 %v263, %v263
    %v266 = vpack.c.bf16 %v264, %v264
    %v267 = vld [vmem:[#allocation5] sm:$0xf]
    %v268 = vld [vmem:[#allocation5 + $0x4] sm:$0xf]
    %v269 = vld [vmem:[#allocation5 + $0x8] sm:$0xf]
    %v270 = vld [vmem:[#allocation5 + $0xc] sm:$0xf]
    %v271 = vld [vmem:[#allocation5 + $0x10] sm:$0xf]
    %v272 = vld [vmem:[#allocation5 + $0x14] sm:$0xf]
    %v273 = vld [vmem:[#allocation5 + $0x18] sm:$0xf]
    %v274 = vld [vmem:[#allocation5 + $0x1c] sm:$0xf]
    %v275 = vld [vmem:[#allocation5 + $0x20] sm:$0xf]
    %v276 = vld [vmem:[#allocation5 + $0x24] sm:$0xf]
    %v277 = vld [vmem:[#allocation5 + $0x28] sm:$0xf]
    %v278 = vld [vmem:[#allocation5 + $0x2c] sm:$0xf]
    %v279 = vld [vmem:[#allocation5 + $0x30] sm:$0xf]
    %v280 = vld [vmem:[#allocation5 + $0x34] sm:$0xf]
    %v281 = vld [vmem:[#allocation5 + $0x38] sm:$0xf]
    %v282 = vld [vmem:[#allocation5 + $0x3c] sm:$0xf]
    %v283 = vld [vmem:[#allocation5 + $0x40] sm:$0xf]
    %v284 = vld [vmem:[#allocation5 + $0x44] sm:$0xf]
    %v285 = vld [vmem:[#allocation5 + $0x48] sm:$0xf]
    %v286 = vld [vmem:[#allocation5 + $0x4c] sm:$0xf]
    %v287 = vld [vmem:[#allocation5 + $0x50] sm:$0xf]
    %v288 = vld [vmem:[#allocation5 + $0x54] sm:$0xf]
    %v289 = vld [vmem:[#allocation5 + $0x58] sm:$0xf]
    %v290 = vld [vmem:[#allocation5 + $0x5c] sm:$0xf]
    %v291 = vld [vmem:[#allocation5 + $0x60] sm:$0xf]
    %v292 = vld [vmem:[#allocation5 + $0x64] sm:$0xf]
    %v293 = vld [vmem:[#allocation5 + $0x68] sm:$0xf]
    %v294 = vld [vmem:[#allocation5 + $0x6c] sm:$0xf]
    %v295 = vld [vmem:[#allocation5 + $0x70] sm:$0xf]
    %v296 = vld [vmem:[#allocation5 + $0x74] sm:$0xf]
    %v297 = vld [vmem:[#allocation5 + $0x78] sm:$0xf]
    %v298 = vld [vmem:[#allocation5 + $0x7c] sm:$0xf]
    %v299 = vld [vmem:[%s6] sm:$0x1]
    %v301 = vlaneseq
    %v302 = vshrl.u32 %v301, 7
    %v303 = vsub.s32 0, %v302
    %v304 = vrot.slane %v299, %v303
    %v338 = vunpack.c.l.b16 %v267
    %v339 = vunpack.c.l.b16 %v268
    %v340 = vunpack.c.l.b16 %v269
    %v341 = vunpack.c.l.b16 %v270
    %v342 = vunpack.c.l.b16 %v271
    %v343 = vunpack.c.l.b16 %v272
    %v344 = vunpack.c.l.b16 %v273
    %v345 = vunpack.c.l.b16 %v274
    %v346 = vunpack.c.l.b16 %v275
    %v347 = vunpack.c.l.b16 %v276
    %v348 = vunpack.c.l.b16 %v277
    %v349 = vunpack.c.l.b16 %v278
    %v350 = vunpack.c.l.b16 %v279
    %v351 = vunpack.c.l.b16 %v280
    %v352 = vunpack.c.l.b16 %v281
    %v353 = vunpack.c.l.b16 %v282
    %v354 = vunpack.c.l.b16 %v283
    %v355 = vunpack.c.l.b16 %v284
    %v356 = vunpack.c.l.b16 %v285
    %v357 = vunpack.c.l.b16 %v286
    %v358 = vunpack.c.l.b16 %v287
    %v359 = vunpack.c.l.b16 %v288
    %v360 = vunpack.c.l.b16 %v289
    %v361 = vunpack.c.l.b16 %v290
    %v362 = vunpack.c.l.b16 %v291
    %v363 = vunpack.c.l.b16 %v292
    %v364 = vunpack.c.l.b16 %v293
    %v365 = vunpack.c.l.b16 %v294
    %v366 = vunpack.c.l.b16 %v295
    %v367 = vunpack.c.l.b16 %v296
    %v368 = vunpack.c.l.b16 %v297
    %v369 = vunpack.c.l.b16 %v298
    %v370 = vpack.c.b16 %v339, %v338
    %v371 = vpack.c.b16 %v341, %v340
    %v372 = vpack.c.b16 %v343, %v342
    %v373 = vpack.c.b16 %v345, %v344
    %v374 = vpack.c.b16 %v347, %v346
    %v375 = vpack.c.b16 %v349, %v348
    %v376 = vpack.c.b16 %v351, %v350
    %v377 = vpack.c.b16 %v353, %v352
    %v378 = vpack.c.b16 %v355, %v354
    %v379 = vpack.c.b16 %v357, %v356
    %v380 = vpack.c.b16 %v359, %v358
    %v381 = vpack.c.b16 %v361, %v360
    %v382 = vpack.c.b16 %v363, %v362
    %v383 = vpack.c.b16 %v365, %v364
    %v384 = vpack.c.b16 %v367, %v366
    %v385 = vpack.c.b16 %v369, %v368
    %402 = vmatprep.subr.bf16.mxu0 0
    %403 = vmatpush1.bf16.msra.mxu0 %v370
    %404 = vmatprep.subr.bf16.mxu0 0
    %405 = vmatpush1.bf16.msra.mxu0 %v371
    %406 = vmatprep.subr.bf16.mxu0 0
    %407 = vmatpush1.bf16.msra.mxu0 %v372
    %408 = vmatprep.subr.bf16.mxu0 0
    %409 = vmatpush1.bf16.msra.mxu0 %v373
    %410 = vmatprep.subr.bf16.mxu0 0
    %411 = vmatpush1.bf16.msra.mxu0 %v374
    %412 = vmatprep.subr.bf16.mxu0 0
    %413 = vmatpush1.bf16.msra.mxu0 %v375
    %414 = vmatprep.subr.bf16.mxu0 0
    %415 = vmatpush1.bf16.msra.mxu0 %v376
    %416 = vmatprep.subr.bf16.mxu0 0
    %417 = vmatpush1.bf16.msra.mxu0 %v377
    %418 = vmatprep.subr.bf16.mxu0 0
    %419 = vmatpush1.bf16.msra.mxu0 %v378
    %420 = vmatprep.subr.bf16.mxu0 0
    %421 = vmatpush1.bf16.msra.mxu0 %v379
    %422 = vmatprep.subr.bf16.mxu0 0
    %423 = vmatpush1.bf16.msra.mxu0 %v380
    %424 = vmatprep.subr.bf16.mxu0 0
    %425 = vmatpush1.bf16.msra.mxu0 %v381
    %426 = vmatprep.subr.bf16.mxu0 0
    %427 = vmatpush1.bf16.msra.mxu0 %v382
    %428 = vmatprep.subr.bf16.mxu0 0
    %429 = vmatpush1.bf16.msra.mxu0 %v383
    %430 = vmatprep.subr.bf16.mxu0 0
    %431 = vmatpush1.bf16.msra.mxu0 %v384
    %432 = vmatprep.subr.bf16.mxu0 0
    %433 = vmatpush1.bf16.msra.mxu0 %v385
    %434 = vmatprep.mubr.bf16.mxu0 %v266
    %435 = vmatmul.mubr.bf16.gmra.mrb[0].mxu0 %v265
    %v436 = vpop.f32.mrb[0].mxu0
    %v437 = vadd.f32 %v304, %v436
    %v438 = vpop.f32.mrb[0].mxu0
    %v439 = vpop.f32.mrb[0].mxu0
    %v440 = vpop.f32.mrb[0].mxu0
    %441 = vdwg.mxu0
    %v442 = vmax.f32 %v437, 0.0
    %v443 = vpack.c.bf16 %v442, %v442
    %v444 = vld [vmem:[%s7] sm:$0xf]
    %v445 = vld [vmem:[%s7 + $0x4] sm:$0xf]
    %v446 = vld [vmem:[%s7 + $0x8] sm:$0xf]
    %v447 = vld [vmem:[%s7 + $0xc] sm:$0xf]
    %v448 = vld [vmem:[%s7 + $0x10] sm:$0xf]
    %v449 = vld [vmem:[%s7 + $0x14] sm:$0xf]
    %v450 = vld [vmem:[%s7 + $0x18] sm:$0xf]
    %v451 = vld [vmem:[%s7 + $0x1c] sm:$0xf]
    %v452 = vld [vmem:[%s7 + $0x20] sm:$0xf]
    %v453 = vld [vmem:[%s7 + $0x24] sm:$0xf]
    %v454 = vld [vmem:[%s7 + $0x28] sm:$0xf]
    %v455 = vld [vmem:[%s7 + $0x2c] sm:$0xf]
    %v456 = vld [vmem:[%s7 + $0x30] sm:$0xf]
    %v457 = vld [vmem:[%s7 + $0x34] sm:$0xf]
    %v458 = vld [vmem:[%s7 + $0x38] sm:$0xf]
    %v459 = vld [vmem:[%s7 + $0x3c] sm:$0xf]
    %v460 = vld [vmem:[%s8] sm:$0x1]
    %v462 = vlaneseq
    %v463 = vshrl.u32 %v462, 7
    %v464 = vsub.s32 0, %v463
    %v465 = vrot.slane %v460, %v464
    %v483 = vunpack.c.l.b16 %v444
    %v484 = vunpack.c.l.b16 %v445
    %v485 = vunpack.c.l.b16 %v446
    %v486 = vunpack.c.l.b16 %v447
    %v487 = vunpack.c.l.b16 %v448
    %v488 = vunpack.c.l.b16 %v449
    %v489 = vunpack.c.l.b16 %v450
    %v490 = vunpack.c.l.b16 %v451
    %v491 = vunpack.c.l.b16 %v452
    %v492 = vunpack.c.l.b16 %v453
    %v493 = vunpack.c.l.b16 %v454
    %v494 = vunpack.c.l.b16 %v455
    %v495 = vunpack.c.l.b16 %v456
    %v496 = vunpack.c.l.b16 %v457
    %v497 = vunpack.c.l.b16 %v458
    %v498 = vunpack.c.l.b16 %v459
    %v499 = vpack.c.b16 %v484, %v483
    %v500 = vpack.c.b16 %v486, %v485
    %v501 = vpack.c.b16 %v488, %v487
    %v502 = vpack.c.b16 %v490, %v489
    %v503 = vpack.c.b16 %v492, %v491
    %v504 = vpack.c.b16 %v494, %v493
    %v505 = vpack.c.b16 %v496, %v495
    %v506 = vpack.c.b16 %v498, %v497
    %515 = vmatprep.subr.bf16.mxu0 0
    %516 = vmatpush1.bf16.msra.mxu0 %v499
    %517 = vmatprep.subr.bf16.mxu0 0
    %518 = vmatpush1.bf16.msra.mxu0 %v500
    %519 = vmatprep.subr.bf16.mxu0 0
    %520 = vmatpush1.bf16.msra.mxu0 %v501
    %521 = vmatprep.subr.bf16.mxu0 0
    %522 = vmatpush1.bf16.msra.mxu0 %v502
    %523 = vmatprep.subr.bf16.mxu0 0
    %524 = vmatpush1.bf16.msra.mxu0 %v503
    %525 = vmatprep.subr.bf16.mxu0 0
    %526 = vmatpush1.bf16.msra.mxu0 %v504
    %527 = vmatprep.subr.bf16.mxu0 0
    %528 = vmatpush1.bf16.msra.mxu0 %v505
    %529 = vmatprep.subr.bf16.mxu0 0
    %530 = vmatpush1.bf16.msra.mxu0 %v506
    %531 = vmatprep.subr.bf16.mxu0 0
    %532 = vmatpush1.bf16.msra.mxu0 0
    %533 = vmatprep.subr.bf16.mxu0 0
    %534 = vmatpush1.bf16.msra.mxu0 0
    %535 = vmatprep.subr.bf16.mxu0 0
    %536 = vmatpush1.bf16.msra.mxu0 0
    %537 = vmatprep.subr.bf16.mxu0 0
    %538 = vmatpush1.bf16.msra.mxu0 0
    %539 = vmatprep.subr.bf16.mxu0 0
    %540 = vmatpush1.bf16.msra.mxu0 0
    %541 = vmatprep.subr.bf16.mxu0 0
    %542 = vmatpush1.bf16.msra.mxu0 0
    %543 = vmatprep.subr.bf16.mxu0 0
    %544 = vmatpush1.bf16.msra.mxu0 0
    %545 = vmatprep.subr.bf16.mxu0 0
    %546 = vmatpush1.bf16.msra.mxu0 0
    %547 = vmatprep.mubr.bf16.mxu0 0
    %548 = vmatmul.mubr.bf16.gmra.mrb[0].mxu0 %v443
    %v549 = vpop.f32.mrb[0].mxu0
    %v550 = vadd.f32 %v465, %v549
    %v551 = vpop.f32.mrb[0].mxu0
    %v552 = vpop.f32.mrb[0].mxu0
    %v553 = vpop.f32.mrb[0].mxu0
    %554 = vdwg.mxu0
    %vm555 = vcmask 64512
    %556 = vst.msk [vmem:[#allocation7] sm:$0xff] %vm555, %v550
    // Predicated region
    $region46: #{tpu_custom_call.1} parent=1 // pred_check
      _
    $region47: #{tpu_custom_call.1} parent=1 // pred_check_branch
      %558 = sbr.rel (0) target = $region49
    $region48: #{tpu_custom_call.1} parent=1 // pred_region
      %s560 = ssub.s32 128, 128
      %561 = vsyncadd [#allocation4], %s560
      %s563 = sshll.u32 [#allocation7], 4
      %s564 = int_to_ptr.vmem [resolvable:$true] %s563
      %566 = dma.vmem_to_hbm [thread:$0]  %s564, 128, %s9, [#allocation4]
    $region49: #{tpu_custom_call.1} parent=1 // pred_fallthru
      _
    // Predicated region
    $region50: #{tpu_custom_call.1} parent=1 // pred_check
      _
    $region51: #{tpu_custom_call.1} parent=1 // pred_check_branch
      %568 = sbr.rel (0) target = $region53
    $region52: #{tpu_custom_call.1} parent=1 // pred_region
      %569 = dma.done [#allocation4], 128
    $region53: #{tpu_custom_call.1} parent=1 // pred_fallthru
      _
    %570 = vsyncpa [#allocation3], 1
    %571 = vsyncpa [#allocation6], 1
    %572 = vsyncpa [#allocation4], 1

</llo_original>
